<compile_context>
chip_gen: v7x
topology: tpu7x:2x2x1
jax: 0.10.0
libtpu: 0.0.40
codegen_flags: <defaults>
</compile_context>

<pallas_src>
import math

import jax
import jax.numpy as jnp
from jax.experimental import pallas as pl
from jax.experimental.pallas import tpu as pltpu


def _last_critic_kernel(b_ref, x_ref, w_ref, o_ref):
    # b_ref: SMEM (1,)    -- bias scalar (f32)
    # x_ref: VMEM (TB, D) -- squeezed activation tile (streamed from HBM)
    # w_ref: VMEM (1, D)  -- Linear weight in its natural lane-major layout
    # o_ref: VMEM (TB, 1) -- per-row dot product + bias
    x = x_ref[...].astype(jnp.float32)               # cast BEFORE multiply (bf16-safe)
    w = w_ref[...].astype(jnp.float32)
    acc = jnp.sum(x * w, axis=-1, keepdims=True)     # VPU mul + XLU lane reduce, f32
    o_ref[...] = (acc + b_ref[0]).astype(o_ref.dtype)


def _round_up(n, m):
    return ((n + m - 1) // m) * m


def _vmem_capacity_bytes():
    try:
        return int(pltpu.get_tpu_info().vmem_capacity_bytes)
    except Exception:
        return 64 * 1024 * 1024  # smallest per-TC VMEM (v7x); safe everywhere


def _pick_tb(B, D, in_itemsize, out_itemsize, budget_bytes):
    # Per-row VMEM cost of the pipelined working set:
    #   2x double-buffered (tb, D) input tile
    # + 2x double-buffered (tb, 1) output block, lane-padded to 128 lanes
    # + 1x (tb, D) f32 product temporary (x*w before the lane reduce)
    bytes_per_row = (2 * D * in_itemsize
                     + 2 * 128 * out_itemsize
                     + 4 * D)
    rows = budget_bytes // max(1, bytes_per_row)
    rows = max(8, (rows // 8) * 8)
    # Keep >= 4 grid steps: v7x's two TCs each get >= 2 pipelined steps.
    rows = min(rows, max(8, _round_up(pl.cdiv(B, 4), 8)))
    return int(rows)


def last_critic_block(x, weight, bias, *, tb=None, force_pallas=False):
    """Forward of LastCriticBlock.

    Args:
      x:      (B, dim, 1, 1) float, NCHW with trivial spatial dims.
      weight: (1, dim) float  (torch.nn.Linear(dim, 1).weight)
      bias:   (1,)    float   (torch.nn.Linear(dim, 1).bias)
      tb:     optional batch tile override (rounded up to a multiple of 8).
      force_pallas: run the Pallas kernel even for tiny shapes (testing).

    Returns:
      (y, None) where y has shape (B,).
    """
    assert x.ndim == 4 and x.shape[2] == 1 and x.shape[3] == 1
    B, D = x.shape[0], x.shape[1]
    x2 = x.reshape(B, D)                 # metadata-only reshape

    in_itemsize = x2.dtype.itemsize
    out_itemsize = x2.dtype.itemsize
    capacity = _vmem_capacity_bytes()

    # Small/medium-shape dispatch: launch + pipeline prologue + glue dwarf the
    # HBM stream time; let XLA fuse the matvec with its producer.
    min_bytes = (8 << 20) if capacity <= (64 << 20) else (4 << 20)
    if not force_pallas and x2.size * in_itemsize < min_bytes:
        out = (x2.astype(jnp.float32) @ weight.astype(jnp.float32).T
               + bias.astype(jnp.float32)).astype(x.dtype)
        return out[:, 0], None

    budget = min(capacity // 2, 32 << 20)
    if tb is None:
        tb = _pick_tb(B, D, in_itemsize, out_itemsize, budget)
    tb = max(8, _round_up(int(tb), 8))

    # No whole-array pad: ragged tb boundaries are handled by Pallas'
    # partial-block masking.  Only pad when B is below one sublane group
    # (<= 7 zero rows, negligible copy; test-only in practice).
    b_work = B
    if B < 8:
        x2 = jnp.pad(x2, ((0, 8 - B), (0, 0)))
        b_work = 8
    tb = min(tb, _round_up(b_work, 8))

    grid = (pl.cdiv(b_work, tb),)
    bias_f32 = bias.astype(jnp.float32)

    # Explicit scoped-VMEM limit sized to the actual pipelined working set.
    work = (2 * tb * D * in_itemsize                       # x double-buffer
            + 2 * tb * 128 * out_itemsize                  # lane-padded out double-buffer
            + tb * D * 4                                   # f32 product temporary
            + 2 * 8 * _round_up(D, 128) * in_itemsize      # weight double-buffer (padded)
            + (1 << 20))                                   # misc slack
    vmem_limit = int(min(capacity - (16 << 20), work + (8 << 20)))
    vmem_limit = max(vmem_limit, 16 << 20)

    cost = pl.CostEstimate(
        flops=2 * B * D,
        transcendentals=0,
        bytes_accessed=(B * D * in_itemsize
                        + D * weight.dtype.itemsize
                        + B * out_itemsize),
    )

    out = pl.pallas_call(
        _last_critic_kernel,
        out_shape=jax.ShapeDtypeStruct((b_work, 1), x.dtype),
        grid=grid,
        in_specs=[
            pl.BlockSpec(memory_space=pltpu.SMEM),         # bias scalar
            pl.BlockSpec((tb, D), lambda i: (i, 0)),       # activation tile (streamed)
            pl.BlockSpec((1, D), lambda i: (0, 0)),        # weight (fetched once, resident)
        ],
        out_specs=pl.BlockSpec((tb, 1), lambda i: (i, 0)),
        compiler_params=pltpu.CompilerParams(
            dimension_semantics=("parallel",),             # v7x: 2 TCs split the batch
            vmem_limit_bytes=vmem_limit,
        ),
        cost_estimate=cost,
    )(bias_f32, x2, weight)

    return out[:B, 0], None


def init_params(key, dim):
    """Deterministic init matching torch.nn.Linear(dim, 1) default scheme."""
    kw, kb = jax.random.split(key)
    bound = 1.0 / math.sqrt(dim)
    weight = jax.random.uniform(kw, (1, dim), jnp.float32, -bound, bound)
    bias = jax.random.uniform(kb, (1,), jnp.float32, -bound, bound)
    return weight, bias


def _ref(x, weight, bias):
    B, D = x.shape[0], x.shape[1]
    y = x.reshape(B, D).astype(jnp.float32) @ weight.astype(jnp.float32).T
    return (y + bias.astype(jnp.float32))[:, 0]


if __name__ == "__main__":
    key = jax.random.PRNGKey(0)
    k1, k2, k3, k4, kp = jax.random.split(key, 5)

    # Case 1: module-consistent tiny shape (B=2, dim=32), forced through the
    # Pallas kernel (the auto-dispatch would hand this to XLA).
    B1, D1 = 2, 32
    w1, b1 = init_params(kp, D1)
    x1 = jax.random.normal(k1, (B1, D1, 1, 1), jnp.float32)
    y1, second1 = last_critic_block(x1, w1, b1, force_pallas=True)
    y1 = jax.block_until_ready(y1)
    assert second1 is None and y1.shape == (B1,)
    assert jnp.allclose(y1, _ref(x1, w1, b1), atol=1e-5, rtol=1e-5)

    # Case 2: ragged batch, multi-tile grid with a partial final block
    # (B=37 not a multiple of tb=16) -- exercises write-side masking with NO pad.
    B2, D2 = 37, 96
    w2, b2 = init_params(kp, D2)
    x2 = jax.random.normal(k2, (B2, D2, 1, 1), jnp.float32)
    y2, _ = last_critic_block(x2, w2, b2, tb=16, force_pallas=True)
    y2 = jax.block_until_ready(y2)
    assert y2.shape == (B2,)
    assert jnp.allclose(y2, _ref(x2, w2, b2), atol=1e-5, rtol=1e-5)

    # Case 3: automatic tile sizing (>= 4 grid steps), ragged batch not a
    # multiple of 8 (B=1000, D=128) -- exercises _pick_tb + vmem_limit path.
    B3, D3 = 1000, 128
    w3, b3 = init_params(kp, D3)
    x3 = jax.random.normal(k3, (B3, D3, 1, 1), jnp.float32)
    y3, _ = last_critic_block(x3, w3, b3, force_pallas=True)
    y3 = jax.block_until_ready(y3)
    assert y3.shape == (B3,)
    assert jnp.allclose(y3, _ref(x3, w3, b3), atol=1e-4, rtol=1e-5)

    # Case 4: small-shape dispatch path (plain XLA fusion), same semantics.
    B4, D4 = 2, 32
    x4 = jax.random.normal(k4, (B4, D4, 1, 1), jnp.float32)
    y4, second4 = last_critic_block(x4, w1, b1)
    y4 = jax.block_until_ready(y4)
    assert second4 is None and y4.shape == (B4,)
    assert jnp.allclose(y4, _ref(x4, w1, b1), atol=1e-5, rtol=1e-5)

    print("KERNEL_OK")
</pallas_src>

<mosaic_0001>
module attributes {stable_mosaic.version = 11 : i64} {
  func.func @_last_critic_kernel(%arg0: i32, %arg1: memref<1xf32, #tpu.memory_space<smem>>, %arg2: memref<8x32xf32, #tpu.memory_space<vmem>>, %arg3: memref<1x32xf32, #tpu.memory_space<vmem>>, %arg4: memref<8x1xf32, #tpu.memory_space<vmem>>) attributes {dimension_semantics = [#tpu.dimension_semantics<parallel>], iteration_bounds = array<i64: 1>, scalar_prefetch = 0 : i64, scratch_operands = 0 : i64, tpu.core_type = #tpu.core_type<tc>, window_params = [{transform_indices = @transform_0, window_bounds = array<i64: 1>}, {transform_indices = @transform_1, window_bounds = array<i64: 8, 32>}, {pipeline_mode = #tpu.pipeline_mode<synchronous>, transform_indices = @transform_2, window_bounds = array<i64: 1, 32>}, {transform_indices = @transform_3, window_bounds = array<i64: 8, 1>}]} {
    %c0 = arith.constant 0 : index
    %c0_0 = arith.constant 0 : index
    %0 = vector.load %arg2[%c0, %c0_0] : memref<8x32xf32, #tpu.memory_space<vmem>>, vector<8x32xf32>
    %c0_1 = arith.constant 0 : index
    %c0_2 = arith.constant 0 : index
    %1 = vector.load %arg3[%c0_1, %c0_2] : memref<1x32xf32, #tpu.memory_space<vmem>>, vector<1x32xf32>
    %2 = vector.broadcast %1 : vector<1x32xf32> to vector<8x32xf32>
    %3 = arith.mulf %0, %2 : vector<8x32xf32>
    %cst = arith.constant dense<0.000000e+00> : vector<8xf32>
    %4 = vector.multi_reduction <add>, %3, %cst [1] : vector<8x32xf32> to vector<8xf32>
    %5 = vector.shape_cast %4 : vector<8xf32> to vector<8x1xf32>
    %c0_3 = arith.constant 0 : index
    %6 = memref.load %arg1[%c0_3] : memref<1xf32, #tpu.memory_space<smem>>
    %7 = vector.broadcast %6 : f32 to vector<8x1xf32>
    %8 = arith.addf %5, %7 : vector<8x1xf32>
    %c0_4 = arith.constant 0 : index
    %c0_5 = arith.constant 0 : index
    %9 = vector.load %arg4[%c0_4, %c0_5] : memref<8x1xf32, #tpu.memory_space<vmem>>, vector<8x1xf32>
    tpu.vector_store %arg4[%c0_4, %c0_5], %8 {strides = array<i32>} : memref<8x1xf32, #tpu.memory_space<vmem>>, vector<8x1xf32>,
    return
  }
  func.func @transform_0(%arg0: i32) -> i32 {
    %c0_i32 = arith.constant 0 : i32
    %c0_i32_0 = arith.constant 0 : i32
    return %c0_i32 : i32
  }
  func.func @transform_1(%arg0: i32) -> (i32, i32) {
    %c0_i32 = arith.constant 0 : i32
    %c0_i32_0 = arith.constant 0 : i32
    return %arg0, %c0_i32 : i32, i32
  }
  func.func @transform_2(%arg0: i32) -> (i32, i32) {
    %c0_i32 = arith.constant 0 : i32
    %c0_i32_0 = arith.constant 0 : i32
    %c0_i32_1 = arith.constant 0 : i32
    return %c0_i32, %c0_i32_0 : i32, i32
  }
  func.func @transform_3(%arg0: i32) -> (i32, i32) {
    %c0_i32 = arith.constant 0 : i32
    %c0_i32_0 = arith.constant 0 : i32
    return %arg0, %c0_i32 : i32, i32
  }
}

</mosaic_0001>

<llo_original>
// kernel: tpu_custom_call.1
$region0: #{tpu_custom_call.1}
  #allocation0 [shape = 'u32[]', space=smem, size = 0x4, offset = 0x4, fixed_abs, tag = 'smem constant byte address 0x4 - core index']
  #allocation1 [shape = 'u32[144,128]{1,0:T(1,128)}', space=vmem, size = 0x12000, scoped, tag = 'internal scratch']
  #allocation2 [shape = 'f32[1]{0:T(128)S(6)}', space=smem, size = 0x200, scoped, tag = 'scoped memory for tpu_custom_call.1']
  %s0 = inlined_call_operand.<no memory space> [shape: f32[1], index: 0, kind: input, shape index: {}]
  %s1 = inlined_call_operand.hbm [shape: f32[8,32], index: 1, kind: input, shape index: {}]
  %s2 = inlined_call_operand.vmem [shape: f32[1,32], index: 2, kind: input, shape index: {}]
  %s3 = inlined_call_operand.vmem [shape: f32[8,1], index: 3, kind: output, shape index: {}]
  %s4 = sld [smem:[#allocation0]]
  $region26: #{tpu_custom_call.1} parent=0
    _
  %s6 = ssub.s32 1, %s4
  %s7 = scalar_select 0, %s6, %s4
  %8 = sst [smem:[#allocation2]] %s0
  $region1: #{tpu_custom_call.1} parent=0
    #allocation3 [shape = 'u8[4096]{0}', space=vmem, size = 0x1000, scoped, tag = 'input window, operand 1, single buffered']
    #allocation4 [shape = 's32[1]{0}', space=sflag, size = 0x4, scoped, tag = 'scoped memory for tpu_custom_call.1']
    %9 = vsyncpa [#allocation4], 0
    // Predicated region
    $region2: #{tpu_custom_call.1} parent=1 // pred_check
      _
    $region3: #{tpu_custom_call.1} parent=1 // pred_check_branch
      %11 = sbr.rel (0) target = $region5
    $region4: #{tpu_custom_call.1} parent=1 // pred_region
      _
    $region5: #{tpu_custom_call.1} parent=1 // pred_fallthru
      _
    // Predicated region
    $region6: #{tpu_custom_call.1} parent=1 // pred_check
      _
    $region7: #{tpu_custom_call.1} parent=1 // pred_check_branch
      %13 = sbr.rel (0) target = $region9
    $region8: #{tpu_custom_call.1} parent=1 // pred_region
      %s15 = ssub.s32 128, 128
      %16 = vsyncadd [#allocation4], %s15
      %s18 = sshll.u32 [#allocation3], 4
      %s19 = int_to_ptr.vmem [resolvable:$true] %s18
      %21 = dma.hbm_to_vmem [thread:$0]  %s1, 128, %s19, [#allocation4]
    $region9: #{tpu_custom_call.1} parent=1 // pred_fallthru
      _
    // Predicated region
    $region10: #{tpu_custom_call.1} parent=1 // pred_check
      _
    $region11: #{tpu_custom_call.1} parent=1 // pred_check_branch
      %23 = sbr.rel (0) target = $region13
    $region12: #{tpu_custom_call.1} parent=1 // pred_region
      _
    $region13: #{tpu_custom_call.1} parent=1 // pred_fallthru
      _
    // Predicated region
    $region14: #{tpu_custom_call.1} parent=1 // pred_check
      _
    $region15: #{tpu_custom_call.1} parent=1 // pred_check_branch
      %25 = sbr.rel (0) target = $region17
    $region16: #{tpu_custom_call.1} parent=1 // pred_region
      %26 = dma.done [#allocation4], 128
    $region17: #{tpu_custom_call.1} parent=1 // pred_fallthru
      _
    %v27 = vld [vmem:[#allocation3] sm:$0xff]
    %v28 = vld [vmem:[%s2] sm:$0x1]
    %v30 = vlaneseq
    %v31 = vshrl.u32 %v30, 7
    %v32 = vsub.s32 0, %v31
    %v33 = vrot.slane %v28, %v32
    %v35 = vmul.f32 %v27, %v33
    %vm36 = vcmask 261120
    %v37 = vsel %vm36, %v35, 0.0
    %38 = vadd.xlane.f32.xlu0 %v37
    %v39 = vpop.xlane.xlu0 %38
    %s40 = sld [smem:[#allocation2]]
    %v41 = vstv %s40
    %v42 = vadd.f32 %v39, %v41
    %vm43 = vcmask 7168
    %44 = vst.msk [vmem:[%s3] sm:$0xff] %vm43, %v42
    // Predicated region
    $region18: #{tpu_custom_call.1} parent=1 // pred_check
      _
    $region19: #{tpu_custom_call.1} parent=1 // pred_check_branch
      %46 = sbr.rel (0) target = $region21
    $region20: #{tpu_custom_call.1} parent=1 // pred_region
      _
    $region21: #{tpu_custom_call.1} parent=1 // pred_fallthru
      _
    // Predicated region
    $region22: #{tpu_custom_call.1} parent=1 // pred_check
      _
    $region23: #{tpu_custom_call.1} parent=1 // pred_check_branch
      %48 = sbr.rel (0) target = $region25
    $region24: #{tpu_custom_call.1} parent=1 // pred_region
      _
    $region25: #{tpu_custom_call.1} parent=1 // pred_fallthru
      _
    %49 = vsyncpa [#allocation4], 1

</llo_original>
